<compile_context>
chip_gen: v6e
topology: v6e:2x2x1
jax: 0.10.0
libtpu: 0.0.40
codegen_flags: <defaults>
</compile_context>

<pallas_src>
import jax
import jax.numpy as jnp
from jax.experimental import pallas as pl
from jax.experimental.pallas import tpu as pltpu

SOS_TOKEN = 1
EOS_TOKEN = 0
MAX_LENGTH = 8  # module default is 50; small value for the synthetic test


def _decoder_kernel(std_ref, h0_ref, c0_ref, e_wih_ref, whh_ref, bias_ref,
                    wout_ref, bout_ref,
                    tok_out_ref, h_out_ref,
                    h_sc, c_sc, tok_sc, done_sc):
    T = std_ref.shape[0]
    B, H = h_sc.shape
    O = e_wih_ref.shape[0]

    # ---- init state (single kernel invocation, so plain straight-line init) ----
    h_sc[...] = h0_ref[...]
    c_sc[...] = c0_ref[...]
    tok_sc[...] = jnp.full((B, 1), SOS_TOKEN, jnp.int32)
    done_sc[0] = 0
    # PyTorch pre-fills output_all with zeros; steps after EOS keep the zeros.
    tok_out_ref[...] = jnp.zeros(tok_out_ref.shape, jnp.int32)

    col = jax.lax.broadcasted_iota(jnp.int32, (B, O), 1)

    def step(t, carry):
        active = done_sc[0] == 0

        @pl.when(active)
        def _():
            # embedding lookup folded into the gate weights: onehot @ (emb @ Wih_cat)
            onehot = (col == tok_sc[...]).astype(jnp.float32)                     # [B, O]
            h = h_sc[...]
            c = c_sc[...]

            gates = (jnp.dot(onehot, e_wih_ref[...], preferred_element_type=jnp.float32)
                     + jnp.dot(h, whh_ref[...], preferred_element_type=jnp.float32)
                     + bias_ref[...])                                             # [B, 4H]

            ingate = jax.nn.sigmoid(gates[:, 0:H])
            forgetgate = jax.nn.sigmoid(gates[:, H:2 * H])
            cellgate = jnp.tanh(gates[:, 2 * H:3 * H])
            outgate = jax.nn.sigmoid(gates[:, 3 * H:4 * H])

            c_new = forgetgate * c + ingate * cellgate
            h_new = outgate * jnp.tanh(c_new)

            # output projection + std[t], then argmax over the vocab (first max index)
            logits = (jnp.dot(h_new, wout_ref[...], preferred_element_type=jnp.float32)
                      + bout_ref[...] + std_ref[t])                               # [B, O]
            m = jnp.max(logits, axis=1, keepdims=True)
            cand = jnp.where(logits == m, col, O)            # sentinel O > any valid index
            tok_new = jnp.min(cand, axis=1, keepdims=True)   # [B, 1] int32

            h_sc[...] = h_new
            c_sc[...] = c_new
            tok_sc[...] = tok_new
            tok_out_ref[pl.ds(t, 1)] = tok_new.reshape(1, B, 1)
            # loop continues only while max(token) > EOS_token
            done_sc[0] = (jnp.max(tok_new) <= EOS_TOKEN).astype(jnp.int32)

        return carry

    jax.lax.fori_loop(0, T, step, 0)

    # final hidden state, written exactly once
    h_out_ref[...] = h_sc[...]


def attn_decoder_forward(encoder_output, std, h, c, params, max_length):
    emb, w_ih, w_hh, bias, wout_t, b_out = params
    B = encoder_output.shape[1]   # PyTorch forward only uses encoder_output for batch size
    H = h.shape[1]
    O = emb.shape[0]
    assert std.shape == (max_length, B, O)

    # One-time host/XLA-side weight folding (outside the kernel, free per call):
    wih_cat = jnp.concatenate([w_ih[0], w_ih[1], w_ih[2], w_ih[3]], axis=1)    # [H, 4H]
    whh_cat = jnp.concatenate([w_hh[0], w_hh[1], w_hh[2], w_hh[3]], axis=1)    # [H, 4H]
    bias_cat = jnp.concatenate([bias[0], bias[1], bias[2], bias[3]], axis=1)   # [1, 4H]
    e_wih = jnp.dot(emb, wih_cat)                                              # [O, 4H]

    tokens, h_out = pl.pallas_call(
        _decoder_kernel,
        out_shape=(jax.ShapeDtypeStruct((max_length, B, 1), jnp.int32),
                   jax.ShapeDtypeStruct((B, H), jnp.float32)),
        # no grid: whole (small) arrays live in VMEM, outputs are written back once
        scratch_shapes=[
            pltpu.VMEM((B, H), jnp.float32),    # h state
            pltpu.VMEM((B, H), jnp.float32),    # c state
            pltpu.VMEM((B, 1), jnp.int32),      # current tokens
            pltpu.SMEM((1,), jnp.int32),        # done flag
        ],
    )(std, h, c, e_wih, whh_cat, bias_cat, wout_t, b_out)

    # TODO(synk): PyTorch returns int64 tokens; JAX default config lacks x64, so int32 is used.
    return tokens[:, :, 0], h_out


def attn_decoder_reference(encoder_output, std, h, c, params, max_length):
    """Pure-JAX reference mirroring the PyTorch forward semantics (unfolded params)."""
    emb, w_ih, w_hh, bias, wout_t, b_out = params
    B = encoder_output.shape[1]
    O = emb.shape[0]
    tok = jnp.full((B,), SOS_TOKEN, jnp.int32)
    done = jnp.array(False)
    tokens_all = []
    for t in range(max_length):
        x = emb[tok]
        gate = lambda g: x @ w_ih[g] + h @ w_hh[g] + bias[g]
        ingate = jax.nn.sigmoid(gate(0))
        forgetgate = jax.nn.sigmoid(gate(1))
        cellgate = jnp.tanh(gate(2))
        outgate = jax.nn.sigmoid(gate(3))
        c_new = forgetgate * c + ingate * cellgate
        h_new = outgate * jnp.tanh(c_new)
        logits = h_new @ wout_t + b_out + std[t]
        col = jnp.arange(O, dtype=jnp.int32)[None, :]
        m = jnp.max(logits, axis=1, keepdims=True)
        new_tok = jnp.min(jnp.where(logits == m, col, O), axis=1).astype(jnp.int32)
        tokens_all.append(jnp.where(done, jnp.zeros_like(new_tok), new_tok))
        h = jnp.where(done, h, h_new)
        c = jnp.where(done, c, c_new)
        tok = jnp.where(done, tok, new_tok)
        done = jnp.logical_or(done, jnp.max(new_tok) <= EOS_TOKEN)
    return jnp.stack(tokens_all, axis=0), h


def init_params(key, hidden_size, output_size):
    H, O = hidden_size, output_size
    ks = jax.random.split(key, 7)
    lim = (6.0 / (H + H)) ** 0.5  # xavier_uniform bound for [H, H] gates
    w_ih = jax.random.uniform(ks[0], (4, H, H), jnp.float32, -lim, lim)
    w_hh = jax.random.uniform(ks[1], (4, H, H), jnp.float32, -lim, lim)
    b_ih = jax.random.normal(ks[2], (4, H), jnp.float32)
    b_hh = jax.random.normal(ks[3], (4, H), jnp.float32)
    bias = (b_ih + b_hh).reshape(4, 1, H)
    emb = jax.random.normal(ks[4], (O, H), jnp.float32)       # nn.Embedding ~ N(0, 1)
    w_out = jax.random.normal(ks[5], (O, H), jnp.float32) / (H ** 0.5)
    b_out = (jax.random.normal(ks[6], (1, O), jnp.float32) / (H ** 0.5))
    return emb, w_ih, w_hh, bias, w_out.T, b_out


if __name__ == "__main__":
    key = jax.random.PRNGKey(0)
    B, H, O, T = 8, 32, 16, MAX_LENGTH
    kp, k1, k2, k3, k4 = jax.random.split(key, 5)

    params = init_params(kp, H, O)
    encoder_output = jax.random.normal(k1, (T, B, H), jnp.float32)
    std = jax.random.normal(k2, (T, B, O), jnp.float32)
    h0 = jax.random.normal(k3, (B, H), jnp.float32)
    c0 = jax.random.normal(k4, (B, H), jnp.float32)

    tokens, h_out = attn_decoder_forward(encoder_output, std, h0, c0, params, T)
    tokens = jax.block_until_ready(tokens)
    h_out = jax.block_until_ready(h_out)

    ref_tokens, ref_h = attn_decoder_reference(encoder_output, std, h0, c0, params, T)
    assert tokens.shape == (T, B) and h_out.shape == (B, H)
    assert bool((tokens == ref_tokens).all()), (tokens, ref_tokens)
    assert bool(jnp.allclose(h_out, ref_h, atol=1e-3, rtol=1e-3))
    print("KERNEL_OK")
</pallas_src>

<mosaic_0001>
module attributes {stable_mosaic.version = 11 : i64} {
  func.func @_decoder_kernel(%arg0: memref<8x8x16xf32, #tpu.memory_space<vmem>>, %arg1: memref<8x32xf32, #tpu.memory_space<vmem>>, %arg2: memref<8x32xf32, #tpu.memory_space<vmem>>, %arg3: memref<16x128xf32, #tpu.memory_space<vmem>>, %arg4: memref<32x128xf32, #tpu.memory_space<vmem>>, %arg5: memref<1x128xf32, #tpu.memory_space<vmem>>, %arg6: memref<32x16xf32, #tpu.memory_space<vmem>>, %arg7: memref<1x16xf32, #tpu.memory_space<vmem>>, %arg8: memref<8x8x1xi32, #tpu.memory_space<vmem>>, %arg9: memref<8x32xf32, #tpu.memory_space<vmem>>, %arg10: memref<8x32xf32, #tpu.memory_space<vmem>>, %arg11: memref<8x32xf32, #tpu.memory_space<vmem>>, %arg12: memref<8x1xi32, #tpu.memory_space<vmem>>, %arg13: memref<1xi32, #tpu.memory_space<smem>>) attributes {dimension_semantics = [], scalar_prefetch = 0 : i64, scratch_operands = 4 : i64, tpu.core_type = #tpu.core_type<tc>} {
    %c0 = arith.constant 0 : index
    %c0_0 = arith.constant 0 : index
    %0 = vector.load %arg1[%c0, %c0_0] : memref<8x32xf32, #tpu.memory_space<vmem>>, vector<8x32xf32>
    %c0_1 = arith.constant 0 : index
    %c0_2 = arith.constant 0 : index
    %1 = vector.load %arg10[%c0_1, %c0_2] : memref<8x32xf32, #tpu.memory_space<vmem>>, vector<8x32xf32>
    tpu.vector_store %arg10[%c0_1, %c0_2], %0 {strides = array<i32>} : memref<8x32xf32, #tpu.memory_space<vmem>>, vector<8x32xf32>,
    %c0_3 = arith.constant 0 : index
    %c0_4 = arith.constant 0 : index
    %2 = vector.load %arg2[%c0_3, %c0_4] : memref<8x32xf32, #tpu.memory_space<vmem>>, vector<8x32xf32>
    %c0_5 = arith.constant 0 : index
    %c0_6 = arith.constant 0 : index
    %3 = vector.load %arg11[%c0_5, %c0_6] : memref<8x32xf32, #tpu.memory_space<vmem>>, vector<8x32xf32>
    tpu.vector_store %arg11[%c0_5, %c0_6], %2 {strides = array<i32>} : memref<8x32xf32, #tpu.memory_space<vmem>>, vector<8x32xf32>,
    %c1_i32 = arith.constant 1 : i32
    %4 = vector.broadcast %c1_i32 : i32 to vector<8x1xi32>
    %c0_7 = arith.constant 0 : index
    %c0_8 = arith.constant 0 : index
    %5 = vector.load %arg12[%c0_7, %c0_8] : memref<8x1xi32, #tpu.memory_space<vmem>>, vector<8x1xi32>
    tpu.vector_store %arg12[%c0_7, %c0_8], %4 {strides = array<i32>} : memref<8x1xi32, #tpu.memory_space<vmem>>, vector<8x1xi32>,
    %c0_i32 = arith.constant 0 : i32
    %c0_9 = arith.constant 0 : index
    %6 = memref.load %arg13[%c0_9] : memref<1xi32, #tpu.memory_space<smem>>
    memref.store %c0_i32, %arg13[%c0_9] : memref<1xi32, #tpu.memory_space<smem>>
    %c0_i32_10 = arith.constant 0 : i32
    %7 = vector.broadcast %c0_i32_10 : i32 to vector<8x8x1xi32>
    %c0_11 = arith.constant 0 : index
    %c0_12 = arith.constant 0 : index
    %c0_13 = arith.constant 0 : index
    %8 = vector.load %arg8[%c0_11, %c0_12, %c0_13] : memref<8x8x1xi32, #tpu.memory_space<vmem>>, vector<8x8x1xi32>
    tpu.vector_store %arg8[%c0_11, %c0_12, %c0_13], %7 {strides = array<i32>} : memref<8x8x1xi32, #tpu.memory_space<vmem>>, vector<8x8x1xi32>,
    %9 = tpu.iota {dimensions = array<i32: 1>} : vector<8x16xi32>
    %c0_i32_14 = arith.constant 0 : i32
    %c8_i32 = arith.constant 8 : i32
    %10 = arith.addi %c0_i32_14, %c8_i32 : i32
    %c1_i32_15 = arith.constant 1 : i32
    scf.for %arg14 = %c0_i32_14 to %10 step %c1_i32_15  : i32 {
      %c0_21 = arith.constant 0 : index
      %13 = memref.load %arg13[%c0_21] : memref<1xi32, #tpu.memory_space<smem>>
      %c0_i32_22 = arith.constant 0 : i32
      %14 = arith.cmpi eq, %13, %c0_i32_22 : i32
      %15 = arith.extui %14 : i1 to i32
      %c0_i32_23 = arith.constant 0 : i32
      %16 = arith.cmpi ne, %15, %c0_i32_23 : i32
      scf.if %16 {
        %c0_24 = arith.constant 0 : index
        %c0_25 = arith.constant 0 : index
        %17 = vector.load %arg12[%c0_24, %c0_25] : memref<8x1xi32, #tpu.memory_space<vmem>>, vector<8x1xi32>
        %18 = vector.broadcast %17 : vector<8x1xi32> to vector<8x16xi32>
        %19 = arith.cmpi eq, %9, %18 : vector<8x16xi32>
        %20 = arith.extui %19 : vector<8x16xi1> to vector<8x16xi32>
        %21 = arith.sitofp %20 : vector<8x16xi32> to vector<8x16xf32>
        %c0_26 = arith.constant 0 : index
        %c0_27 = arith.constant 0 : index
        %22 = vector.load %arg10[%c0_26, %c0_27] : memref<8x32xf32, #tpu.memory_space<vmem>>, vector<8x32xf32>
        %c0_28 = arith.constant 0 : index
        %c0_29 = arith.constant 0 : index
        %23 = vector.load %arg11[%c0_28, %c0_29] : memref<8x32xf32, #tpu.memory_space<vmem>>, vector<8x32xf32>
        %c0_30 = arith.constant 0 : index
        %c0_31 = arith.constant 0 : index
        %24 = vector.load %arg3[%c0_30, %c0_31] : memref<16x128xf32, #tpu.memory_space<vmem>>, vector<16x128xf32>
        %cst = arith.constant dense<0.000000e+00> : vector<8x128xf32>
        %25 = tpu.matmul %21, %24, %cst {dimension_numbers = #tpu.dot_dimension_numbers<[1], [0], [0], [1], [0, 0, 1, 1], [], []>} : vector<8x16xf32>, vector<16x128xf32>, vector<8x128xf32> -> vector<8x128xf32>
        %c0_32 = arith.constant 0 : index
        %c0_33 = arith.constant 0 : index
        %26 = vector.load %arg4[%c0_32, %c0_33] : memref<32x128xf32, #tpu.memory_space<vmem>>, vector<32x128xf32>
        %cst_34 = arith.constant dense<0.000000e+00> : vector<8x128xf32>
        %27 = tpu.matmul %22, %26, %cst_34 {dimension_numbers = #tpu.dot_dimension_numbers<[1], [0], [0], [1], [0, 0, 1, 1], [], []>} : vector<8x32xf32>, vector<32x128xf32>, vector<8x128xf32> -> vector<8x128xf32>
        %28 = arith.addf %25, %27 : vector<8x128xf32>
        %c0_35 = arith.constant 0 : index
        %c0_36 = arith.constant 0 : index
        %29 = vector.load %arg5[%c0_35, %c0_36] : memref<1x128xf32, #tpu.memory_space<vmem>>, vector<1x128xf32>
        %30 = vector.broadcast %29 : vector<1x128xf32> to vector<8x128xf32>
        %31 = arith.addf %28, %30 : vector<8x128xf32>
        %32 = vector.extract_strided_slice %31 {offsets = [0, 0], sizes = [8, 32], strides = [1, 1]} : vector<8x128xf32> to vector<8x32xf32>
        %33 = arith.negf %32 : vector<8x32xf32>
        %34 = math.exp %33 : vector<8x32xf32>
        %cst_37 = arith.constant 1.000000e+00 : f32
        %35 = vector.broadcast %cst_37 : f32 to vector<8x32xf32>
        %36 = arith.addf %35, %34 : vector<8x32xf32>
        %37 = arith.divf %35, %36 : vector<8x32xf32>
        %38 = vector.extract_strided_slice %31 {offsets = [0, 32], sizes = [8, 32], strides = [1, 1]} : vector<8x128xf32> to vector<8x32xf32>
        %39 = arith.negf %38 : vector<8x32xf32>
        %40 = math.exp %39 : vector<8x32xf32>
        %cst_38 = arith.constant 1.000000e+00 : f32
        %41 = vector.broadcast %cst_38 : f32 to vector<8x32xf32>
        %42 = arith.addf %41, %40 : vector<8x32xf32>
        %43 = arith.divf %41, %42 : vector<8x32xf32>
        %44 = vector.extract_strided_slice %31 {offsets = [0, 64], sizes = [8, 32], strides = [1, 1]} : vector<8x128xf32> to vector<8x32xf32>
        %45 = math.tanh %44 : vector<8x32xf32>
        %46 = vector.extract_strided_slice %31 {offsets = [0, 96], sizes = [8, 32], strides = [1, 1]} : vector<8x128xf32> to vector<8x32xf32>
        %47 = arith.negf %46 : vector<8x32xf32>
        %48 = math.exp %47 : vector<8x32xf32>
        %cst_39 = arith.constant 1.000000e+00 : f32
        %49 = vector.broadcast %cst_39 : f32 to vector<8x32xf32>
        %50 = arith.addf %49, %48 : vector<8x32xf32>
        %51 = arith.divf %49, %50 : vector<8x32xf32>
        %52 = arith.mulf %43, %23 : vector<8x32xf32>
        %53 = arith.mulf %37, %45 : vector<8x32xf32>
        %54 = arith.addf %52, %53 : vector<8x32xf32>
        %55 = math.tanh %54 : vector<8x32xf32>
        %56 = arith.mulf %51, %55 : vector<8x32xf32>
        %c0_40 = arith.constant 0 : index
        %c0_41 = arith.constant 0 : index
        %57 = vector.load %arg6[%c0_40, %c0_41] : memref<32x16xf32, #tpu.memory_space<vmem>>, vector<32x16xf32>
        %cst_42 = arith.constant dense<0.000000e+00> : vector<8x16xf32>
        %58 = tpu.matmul %56, %57, %cst_42 {dimension_numbers = #tpu.dot_dimension_numbers<[1], [0], [0], [1], [0, 0, 1, 1], [], []>} : vector<8x32xf32>, vector<32x16xf32>, vector<8x16xf32> -> vector<8x16xf32>
        %c0_43 = arith.constant 0 : index
        %c0_44 = arith.constant 0 : index
        %59 = vector.load %arg7[%c0_43, %c0_44] : memref<1x16xf32, #tpu.memory_space<vmem>>, vector<1x16xf32>
        %60 = vector.broadcast %59 : vector<1x16xf32> to vector<8x16xf32>
        %61 = arith.addf %58, %60 : vector<8x16xf32>
        %62 = arith.index_cast %arg14 : i32 to index
        %c0_45 = arith.constant 0 : index
        %c0_46 = arith.constant 0 : index
        %63 = vector.load %arg0[%62, %c0_45, %c0_46] : memref<8x8x16xf32, #tpu.memory_space<vmem>>, vector<1x8x16xf32>
        %64 = vector.shape_cast %63 : vector<1x8x16xf32> to vector<8x16xf32>
        %65 = arith.addf %61, %64 : vector<8x16xf32>
        %cst_47 = arith.constant dense<0xFF800000> : vector<8xf32>
        %66 = vector.multi_reduction <maximumf>, %65, %cst_47 [1] : vector<8x16xf32> to vector<8xf32>
        %67 = vector.shape_cast %66 : vector<8xf32> to vector<8x1xf32>
        %68 = vector.broadcast %67 : vector<8x1xf32> to vector<8x16xf32>
        %69 = arith.cmpf oeq, %65, %68 : vector<8x16xf32>
        %c16_i32 = arith.constant 16 : i32
        %70 = vector.broadcast %c16_i32 : i32 to vector<8x16xi32>
        %71 = arith.select %69, %9, %70 : vector<8x16xi1>, vector<8x16xi32>
        %cst_48 = arith.constant dense<2147483647> : vector<8xi32>
        %72 = vector.multi_reduction <minsi>, %71, %cst_48 [1] : vector<8x16xi32> to vector<8xi32>
        %73 = vector.shape_cast %72 : vector<8xi32> to vector<8x1xi32>
        %c0_49 = arith.constant 0 : index
        %c0_50 = arith.constant 0 : index
        %74 = vector.load %arg10[%c0_49, %c0_50] : memref<8x32xf32, #tpu.memory_space<vmem>>, vector<8x32xf32>
        tpu.vector_store %arg10[%c0_49, %c0_50], %56 {strides = array<i32>} : memref<8x32xf32, #tpu.memory_space<vmem>>, vector<8x32xf32>,
        %c0_51 = arith.constant 0 : index
        %c0_52 = arith.constant 0 : index
        %75 = vector.load %arg11[%c0_51, %c0_52] : memref<8x32xf32, #tpu.memory_space<vmem>>, vector<8x32xf32>
        tpu.vector_store %arg11[%c0_51, %c0_52], %54 {strides = array<i32>} : memref<8x32xf32, #tpu.memory_space<vmem>>, vector<8x32xf32>,
        %c0_53 = arith.constant 0 : index
        %c0_54 = arith.constant 0 : index
        %76 = vector.load %arg12[%c0_53, %c0_54] : memref<8x1xi32, #tpu.memory_space<vmem>>, vector<8x1xi32>
        tpu.vector_store %arg12[%c0_53, %c0_54], %73 {strides = array<i32>} : memref<8x1xi32, #tpu.memory_space<vmem>>, vector<8x1xi32>,
        %77 = vector.shape_cast %73 : vector<8x1xi32> to vector<1x8x1xi32>
        %78 = arith.index_cast %arg14 : i32 to index
        %c0_55 = arith.constant 0 : index
        %c0_56 = arith.constant 0 : index
        %79 = vector.load %arg8[%78, %c0_55, %c0_56] : memref<8x8x1xi32, #tpu.memory_space<vmem>>, vector<1x8x1xi32>
        tpu.vector_store %arg8[%78, %c0_55, %c0_56], %77 {strides = array<i32>} : memref<8x8x1xi32, #tpu.memory_space<vmem>>, vector<1x8x1xi32>,
        %80 = vector.shape_cast %73 : vector<8x1xi32> to vector<1x8x1xi32>
        %cst_57 = arith.constant dense<-2147483648> : vector<1xi32>
        %81 = vector.multi_reduction <maxsi>, %80, %cst_57 [1, 2] : vector<1x8x1xi32> to vector<1xi32>
        %82 = vector.shape_cast %81 : vector<1xi32> to vector<1x1x1xi32>
        %83 = vector.extract %82[0, 0, 0] : i32 from vector<1x1x1xi32>
        %c0_i32_58 = arith.constant 0 : i32
        %84 = arith.cmpi sle, %83, %c0_i32_58 : i32
        %85 = arith.extui %84 : i1 to i32
        %c0_59 = arith.constant 0 : index
        %86 = memref.load %arg13[%c0_59] : memref<1xi32, #tpu.memory_space<smem>>
        memref.store %85, %arg13[%c0_59] : memref<1xi32, #tpu.memory_space<smem>>
      } else {
      }
    }
    %c8_i32_16 = arith.constant 8 : i32
    %c0_17 = arith.constant 0 : index
    %c0_18 = arith.constant 0 : index
    %11 = vector.load %arg10[%c0_17, %c0_18] : memref<8x32xf32, #tpu.memory_space<vmem>>, vector<8x32xf32>
    %c0_19 = arith.constant 0 : index
    %c0_20 = arith.constant 0 : index
    %12 = vector.load %arg9[%c0_19, %c0_20] : memref<8x32xf32, #tpu.memory_space<vmem>>, vector<8x32xf32>
    tpu.vector_store %arg9[%c0_19, %c0_20], %11 {strides = array<i32>} : memref<8x32xf32, #tpu.memory_space<vmem>>, vector<8x32xf32>,
    return
  }
}

</mosaic_0001>

<llo_original>
// kernel: tpu_custom_call.1
$region0: #{tpu_custom_call.1}
  #allocation0 [shape = 'u32[]', space=smem, size = 0x4, offset = 0x4, fixed_abs, tag = 'smem constant byte address 0x4 - core index']
  #allocation1 [shape = 'u32[144,128]{1,0:T(1,128)}', space=vmem, size = 0x12000, scoped, tag = 'internal scratch']
  #allocation2 [shape = 'f32[8,32]{1,0:T(8,128)}', space=vmem, size = 0x1000, scoped, tag = 'scratch operand']
  #allocation3 [shape = 'f32[8,32]{1,0:T(8,128)}', space=vmem, size = 0x1000, scoped, tag = 'scratch operand']
  #allocation4 [shape = 's32[8,1]{1,0:T(8,128)}', space=vmem, size = 0x1000, scoped, tag = 'scratch operand']
  #allocation5 [shape = 's32[1]{0:T(128)}', space=smem, size = 0x200, scoped, tag = 'scratch operand']
  %s0 = inlined_call_operand.hbm [shape: f32[8,8,16], index: 0, kind: input, shape index: {}]
  %s1 = inlined_call_operand.hbm [shape: f32[8,32], index: 1, kind: input, shape index: {}]
  %s2 = inlined_call_operand.hbm [shape: f32[8,32], index: 2, kind: input, shape index: {}]
  %s3 = inlined_call_operand.vmem [shape: f32[16,128], index: 3, kind: input, shape index: {}]
  %s4 = inlined_call_operand.vmem [shape: f32[32,128], index: 4, kind: input, shape index: {}]
  %s5 = inlined_call_operand.vmem [shape: f32[1,128], index: 5, kind: input, shape index: {}]
  %s6 = inlined_call_operand.vmem [shape: f32[32,16], index: 6, kind: input, shape index: {}]
  %s7 = inlined_call_operand.vmem [shape: f32[1,16], index: 7, kind: input, shape index: {}]
  %s8 = inlined_call_operand.vmem [shape: s32[8,8,1], index: 8, kind: output, shape index: {0}]
  %s9 = inlined_call_operand.hbm [shape: f32[8,32], index: 9, kind: output, shape index: {1}]
  %10 = xla_tuple %s8, %s9
  %s11 = sld [smem:[#allocation0]]
  $region73: #{tpu_custom_call.1} parent=0
    _
  %s13 = ssub.s32 1, %s11
  %s14 = scalar_select 0, %s13, %s11
  $region1: #{tpu_custom_call.1} parent=0
    #allocation6 [shape = 'u8[32768]{0}', space=vmem, size = 0x8000, scoped, tag = 'input window, operand 0, single buffered']
    #allocation7 [shape = 's32[1]{0}', space=sflag, size = 0x4, scoped, tag = 'scoped memory for tpu_custom_call.1']
    #allocation8 [shape = 's32[1]{0}', space=sflag, size = 0x4, scoped, tag = 'scoped memory for tpu_custom_call.1']
    #allocation9 [shape = 'u8[4096]{0}', space=vmem, size = 0x1000, scoped, tag = 'input window, operand 1, single buffered']
    #allocation10 [shape = 's32[1]{0}', space=sflag, size = 0x4, scoped, tag = 'scoped memory for tpu_custom_call.1']
    #allocation11 [shape = 'u8[4096]{0}', space=vmem, size = 0x1000, scoped, tag = 'input window, operand 2, single buffered']
    #allocation12 [shape = 'u8[4096]{0}', space=vmem, size = 0x1000, scoped, tag = 'output window, operand 1, single buffered']
    %15 = vsyncpa [#allocation7], 0
    %16 = vsyncpa [#allocation10], 0
    %17 = vsyncpa [#allocation8], 0
    // Predicated region
    $region2: #{tpu_custom_call.1} parent=1 // pred_check
      _
    $region3: #{tpu_custom_call.1} parent=1 // pred_check_branch
      %19 = sbr.rel (0) target = $region5
    $region4: #{tpu_custom_call.1} parent=1 // pred_region
      %s21 = ssub.s32 1024, 1024
      %22 = vsyncadd [#allocation7], %s21
      %s23 = sshll.u32 [#allocation6], 4
      %s24 = int_to_ptr.vmem [resolvable:$true] %s23
      %29 = dma.hbm_to_vmem [thread:$0]  %s0, 1024, %s24, [#allocation7], 128, 128, 8
    $region5: #{tpu_custom_call.1} parent=1 // pred_fallthru
      _
    // Predicated region
    $region6: #{tpu_custom_call.1} parent=1 // pred_check
      _
    $region7: #{tpu_custom_call.1} parent=1 // pred_check_branch
      %31 = sbr.rel (0) target = $region9
    $region8: #{tpu_custom_call.1} parent=1 // pred_region
      %s33 = ssub.s32 128, 128
      %34 = vsyncadd [#allocation10], %s33
      %s36 = sshll.u32 [#allocation9], 4
      %s37 = int_to_ptr.vmem [resolvable:$true] %s36
      %39 = dma.hbm_to_vmem [thread:$0]  %s1, 128, %s37, [#allocation10]
    $region9: #{tpu_custom_call.1} parent=1 // pred_fallthru
      _
    // Predicated region
    $region10: #{tpu_custom_call.1} parent=1 // pred_check
      _
    $region11: #{tpu_custom_call.1} parent=1 // pred_check_branch
      %41 = sbr.rel (0) target = $region13
    $region12: #{tpu_custom_call.1} parent=1 // pred_region
      %s43 = ssub.s32 128, 128
      %44 = vsyncadd [#allocation10], %s43
      %s46 = sshll.u32 [#allocation11], 4
      %s47 = int_to_ptr.vmem [resolvable:$true] %s46
      %49 = dma.hbm_to_vmem [thread:$0]  %s2, 128, %s47, [#allocation10]
    $region13: #{tpu_custom_call.1} parent=1 // pred_fallthru
      _
    // Predicated region
    $region14: #{tpu_custom_call.1} parent=1 // pred_check
      _
    $region15: #{tpu_custom_call.1} parent=1 // pred_check_branch
      %51 = sbr.rel (0) target = $region17
    $region16: #{tpu_custom_call.1} parent=1 // pred_region
      _
    $region17: #{tpu_custom_call.1} parent=1 // pred_fallthru
      _
    // Predicated region
    $region18: #{tpu_custom_call.1} parent=1 // pred_check
      _
    $region19: #{tpu_custom_call.1} parent=1 // pred_check_branch
      %53 = sbr.rel (0) target = $region21
    $region20: #{tpu_custom_call.1} parent=1 // pred_region
      _
    $region21: #{tpu_custom_call.1} parent=1 // pred_fallthru
      _
    // Predicated region
    $region22: #{tpu_custom_call.1} parent=1 // pred_check
      _
    $region23: #{tpu_custom_call.1} parent=1 // pred_check_branch
      %55 = sbr.rel (0) target = $region25
    $region24: #{tpu_custom_call.1} parent=1 // pred_region
      _
    $region25: #{tpu_custom_call.1} parent=1 // pred_fallthru
      _
    // Predicated region
    $region26: #{tpu_custom_call.1} parent=1 // pred_check
      _
    $region27: #{tpu_custom_call.1} parent=1 // pred_check_branch
      %57 = sbr.rel (0) target = $region29
    $region28: #{tpu_custom_call.1} parent=1 // pred_region
      _
    $region29: #{tpu_custom_call.1} parent=1 // pred_fallthru
      _
    // Predicated region
    $region30: #{tpu_custom_call.1} parent=1 // pred_check
      _
    $region31: #{tpu_custom_call.1} parent=1 // pred_check_branch
      %59 = sbr.rel (0) target = $region33
    $region32: #{tpu_custom_call.1} parent=1 // pred_region
      _
    $region33: #{tpu_custom_call.1} parent=1 // pred_fallthru
      _
    // Predicated region
    $region34: #{tpu_custom_call.1} parent=1 // pred_check
      _
    $region35: #{tpu_custom_call.1} parent=1 // pred_check_branch
      %61 = sbr.rel (0) target = $region37
    $region36: #{tpu_custom_call.1} parent=1 // pred_region
      %62 = dma.done [#allocation7], 1024
    $region37: #{tpu_custom_call.1} parent=1 // pred_fallthru
      _
    // Predicated region
    $region38: #{tpu_custom_call.1} parent=1 // pred_check
      _
    $region39: #{tpu_custom_call.1} parent=1 // pred_check_branch
      %64 = sbr.rel (0) target = $region41
    $region40: #{tpu_custom_call.1} parent=1 // pred_region
      %65 = dma.done [#allocation10], 128
    $region41: #{tpu_custom_call.1} parent=1 // pred_fallthru
      _
    // Predicated region
    $region42: #{tpu_custom_call.1} parent=1 // pred_check
      _
    $region43: #{tpu_custom_call.1} parent=1 // pred_check_branch
      %67 = sbr.rel (0) target = $region45
    $region44: #{tpu_custom_call.1} parent=1 // pred_region
      %68 = dma.done [#allocation10], 128
    $region45: #{tpu_custom_call.1} parent=1 // pred_fallthru
      _
    %v69 = vld [vmem:[#allocation9] sm:$0xff]
    %vm70 = vcmask 261120
    %71 = vst.msk [vmem:[#allocation2] sm:$0xff] %vm70, %v69
    %v72 = vld [vmem:[#allocation11] sm:$0xff]
    %73 = vst.msk [vmem:[#allocation3] sm:$0xff] %vm70, %v72
    %vm74 = vcmask 7168
    %75 = vst.msk [vmem:[#allocation4] sm:$0xff] %vm74, 1
    %s76 = scalar_lea.smem [#allocation5], 0
    %77 = sst [smem:[%s76]] 0
    %78 = vst.msk [vmem:[%s8] sm:$0xff] %vm74, 0
    %79 = vst.msk [vmem:[%s8 + $0x8] sm:$0xff] %vm74, 0
    %80 = vst.msk [vmem:[%s8 + $0x10] sm:$0xff] %vm74, 0
    %81 = vst.msk [vmem:[%s8 + $0x18] sm:$0xff] %vm74, 0
    %82 = vst.msk [vmem:[%s8 + $0x20] sm:$0xff] %vm74, 0
    %83 = vst.msk [vmem:[%s8 + $0x28] sm:$0xff] %vm74, 0
    %84 = vst.msk [vmem:[%s8 + $0x30] sm:$0xff] %vm74, 0
    %85 = vst.msk [vmem:[%s8 + $0x38] sm:$0xff] %vm74, 0
    %v86 = vlaneseq
    %v87 = vand.u32 %v86, 127
    loop: start=0, step=1, limit=8
    $region46: #{tpu_custom_call.1} parent=1 // loop_pre_header
      _
    $region47: #{tpu_custom_call.1} parent=1 // loop_header
      %s89 = sphi 0, %s93
      %p90 = scmp.ge.s32.totalorder %s89, 8
    $region48: #{tpu_custom_call.1} parent=1 // loop_header_branch
      %92 = sbr.rel (%p90) target = $region52
    $region49: #{tpu_custom_call.1} parent=1 // loop_body
      %s94 = sld [smem:[#allocation5]]
      %p95 = scmp.eq.s32.totalorder %s94, 0
      // Predicated region
      $region53: #{tpu_custom_call.1} parent=49 // pred_check
        %p96 = pneg %p95
      $region54: #{tpu_custom_call.1} parent=49 // pred_check_branch
        %98 = sbr.rel (%p96) target = $region56
      $region55: #{tpu_custom_call.1} parent=49 // pred_region
        %v99 = vld [vmem:[#allocation4] sm:$0xff]
        %100 = vset.pattern.permute.xlu0 0
        %101 = vperm.xlu0 %100, %v99
        %v102 = vpop.permute.xlu0 %101
        %vm103 = vcmp.eq.s32.totalorder %v87, %v102
        %v104 = vsel %vm103, 1, 0
        %v105 = vcvt.s32.f32 %v104
        %v106 = vld [vmem:[#allocation2] sm:$0xff]
        %v107 = vld [vmem:[#allocation3] sm:$0xff]
        %v108 = vld [vmem:[%s3] sm:$0xff]
        %v109 = vld [vmem:[%s3 + $0x8] sm:$0xff]
        %v110 = vld [vmem:[%s4] sm:$0xff]
        %v111 = vld [vmem:[%s4 + $0x8] sm:$0xff]
        %v112 = vld [vmem:[%s4 + $0x10] sm:$0xff]
        %v113 = vld [vmem:[%s4 + $0x18] sm:$0xff]
        %v115 = vsel %vm70, %v106, 0
        %117 = vmatprep.subr.mxu0 0.0
        %118 = vmatpush1.msra.mxu0 0.0
        %119 = vmatprep.subr.mxu0 0.0
        %120 = vmatpush1.msra.mxu0 0.0
        %121 = vmatprep.subr.mxu0 0.0
        %122 = vmatpush1.msra.mxu0 0.0
        %123 = vmatprep.subr.mxu0 0.0
        %124 = vmatpush1.msra.mxu0 0.0
        %125 = vmatprep.subr.mxu0 0.0
        %126 = vmatpush1.msra.mxu0 0.0
        %127 = vmatprep.subr.mxu0 0.0
        %128 = vmatpush1.msra.mxu0 0.0
        %129 = vmatprep.subr.mxu0 0.0
        %130 = vmatpush1.msra.mxu0 0.0
        %131 = vmatprep.subr.mxu0 0.0
        %132 = vmatpush1.msra.mxu0 0.0
        %133 = vmatprep.subr.mxu0 0.0
        %134 = vmatpush1.msra.mxu0 0.0
        %135 = vmatprep.subr.mxu0 0.0
        %136 = vmatpush1.msra.mxu0 0.0
        %137 = vmatprep.subr.mxu0 0.0
        %138 = vmatpush1.msra.mxu0 0.0
        %139 = vmatprep.subr.mxu0 0.0
        %140 = vmatpush1.msra.mxu0 0.0
        %141 = vmatprep.subr.mxu0 0.0
        %142 = vmatpush1.msra.mxu0 %v113
        %143 = vmatprep.subr.mxu0 0.0
        %144 = vmatpush1.msra.mxu0 %v112
        %145 = vmatprep.subr.mxu0 0.0
        %146 = vmatpush1.msra.mxu0 %v111
        %147 = vmatprep.subr.mxu0 0.0
        %148 = vmatpush1.msra.mxu0 %v110
        %149 = vmatprep.subr.mxu0 0.0
        %150 = vmatpush2.msra.mxu0 0.0
        %151 = vmatprep.subr.mxu0 0.0
        %152 = vmatpush2.msra.mxu0 0.0
        %153 = vmatprep.subr.mxu0 0.0
        %154 = vmatpush2.msra.mxu0 0.0
        %155 = vmatprep.subr.mxu0 0.0
        %156 = vmatpush2.msra.mxu0 0.0
        %157 = vmatprep.subr.mxu0 0.0
        %158 = vmatpush2.msra.mxu0 0.0
        %159 = vmatprep.subr.mxu0 0.0
        %160 = vmatpush2.msra.mxu0 0.0
        %161 = vmatprep.subr.mxu0 0.0
        %162 = vmatpush2.msra.mxu0 0.0
        %163 = vmatprep.subr.mxu0 0.0
        %164 = vmatpush2.msra.mxu0 0.0
        %165 = vmatprep.subr.mxu0 0.0
        %166 = vmatpush2.msra.mxu0 0.0
        %167 = vmatprep.subr.mxu0 0.0
        %168 = vmatpush2.msra.mxu0 0.0
        %169 = vmatprep.subr.mxu0 0.0
        %170 = vmatpush2.msra.mxu0 0.0
        %171 = vmatprep.subr.mxu0 0.0
        %172 = vmatpush2.msra.mxu0 0.0
        %173 = vmatprep.subr.mxu0 0.0
        %174 = vmatpush2.msra.mxu0 0.0
        %175 = vmatprep.subr.mxu0 0.0
        %176 = vmatpush2.msra.mxu0 0.0
        %177 = vmatprep.subr.mxu0 0.0
        %178 = vmatpush2.msra.mxu0 0.0
        %179 = vmatprep.subr.mxu0 0.0
        %180 = vmatpush2.msra.mxu0 0.0
        %181 = vmatprep.mubr.f32.mxu0 0.0
        %182 = vmatmul.mubr.f32.gmra.mxu0 %v115
        %v183 = vpop.f32.mrf.mxu0
        %v184 = vadd.f32 0.0, %v183
        %v185 = vpop.f32.mrf.mxu0
        %186 = vdwg.mxu0
        %vm187 = vcmask 130048
        %v189 = vsel %vm187, %v105, 0
        %191 = vmatprep.subr.mxu0 0.0
        %192 = vmatpush1.msra.mxu0 0.0
        %193 = vmatprep.subr.mxu0 0.0
        %194 = vmatpush1.msra.mxu0 0.0
        %195 = vmatprep.subr.mxu0 0.0
        %196 = vmatpush1.msra.mxu0 0.0
        %197 = vmatprep.subr.mxu0 0.0
        %198 = vmatpush1.msra.mxu0 0.0
        %199 = vmatprep.subr.mxu0 0.0
        %200 = vmatpush1.msra.mxu0 0.0
        %201 = vmatprep.subr.mxu0 0.0
        %202 = vmatpush1.msra.mxu0 0.0
        %203 = vmatprep.subr.mxu0 0.0
        %204 = vmatpush1.msra.mxu0 0.0
        %205 = vmatprep.subr.mxu0 0.0
        %206 = vmatpush1.msra.mxu0 0.0
        %207 = vmatprep.subr.mxu0 0.0
        %208 = vmatpush1.msra.mxu0 0.0
        %209 = vmatprep.subr.mxu0 0.0
        %210 = vmatpush1.msra.mxu0 0.0
        %211 = vmatprep.subr.mxu0 0.0
        %212 = vmatpush1.msra.mxu0 0.0
        %213 = vmatprep.subr.mxu0 0.0
        %214 = vmatpush1.msra.mxu0 0.0
        %215 = vmatprep.subr.mxu0 0.0
        %216 = vmatpush1.msra.mxu0 0.0
        %217 = vmatprep.subr.mxu0 0.0
        %218 = vmatpush1.msra.mxu0 0.0
        %219 = vmatprep.subr.mxu0 0.0
        %220 = vmatpush1.msra.mxu0 %v109
        %221 = vmatprep.subr.mxu0 0.0
        %222 = vmatpush1.msra.mxu0 %v108
        %223 = vmatprep.subr.mxu0 0.0
        %224 = vmatpush2.msra.mxu0 0.0
        %225 = vmatprep.subr.mxu0 0.0
        %226 = vmatpush2.msra.mxu0 0.0
        %227 = vmatprep.subr.mxu0 0.0
        %228 = vmatpush2.msra.mxu0 0.0
        %229 = vmatprep.subr.mxu0 0.0
        %230 = vmatpush2.msra.mxu0 0.0
        %231 = vmatprep.subr.mxu0 0.0
        %232 = vmatpush2.msra.mxu0 0.0
        %233 = vmatprep.subr.mxu0 0.0
        %234 = vmatpush2.msra.mxu0 0.0
        %235 = vmatprep.subr.mxu0 0.0
        %236 = vmatpush2.msra.mxu0 0.0
        %237 = vmatprep.subr.mxu0 0.0
        %238 = vmatpush2.msra.mxu0 0.0
        %239 = vmatprep.subr.mxu0 0.0
        %240 = vmatpush2.msra.mxu0 0.0
        %241 = vmatprep.subr.mxu0 0.0
        %242 = vmatpush2.msra.mxu0 0.0
        %243 = vmatprep.subr.mxu0 0.0
        %244 = vmatpush2.msra.mxu0 0.0
        %245 = vmatprep.subr.mxu0 0.0
        %246 = vmatpush2.msra.mxu0 0.0
        %247 = vmatprep.subr.mxu0 0.0
        %248 = vmatpush2.msra.mxu0 0.0
        %249 = vmatprep.subr.mxu0 0.0
        %250 = vmatpush2.msra.mxu0 0.0
        %251 = vmatprep.subr.mxu0 0.0
        %252 = vmatpush2.msra.mxu0 0.0
        %253 = vmatprep.subr.mxu0 0.0
        %254 = vmatpush2.msra.mxu0 0.0
        %255 = vmatprep.mubr.f32.mxu0 0.0
        %256 = vmatmul.mubr.f32.gmra.mxu0 %v189
        %v257 = vpop.f32.mrf.mxu0
        %v258 = vadd.f32 %v184, %v257
        %v259 = vpop.f32.mrf.mxu0
        %260 = vdwg.mxu0
        %v261 = vld [vmem:[%s5] sm:$0x1]
        %v263 = vlaneseq
        %v264 = vshrl.u32 %v263, 7
        %v265 = vsub.s32 0, %v264
        %v266 = vrot.slane %v261, %v265
        %v268 = vadd.f32 %v258, %v266
        %v269 = vxor.u32 %v268, 2147483648
        %v270 = vmul.f32 %v269, 1.442695
        %v271 = vpow.pop %v270
        %v272 = vadd.f32 %v271, 1.0
        %v273 = vrcp.pop %v272
        %v274 = vmul.f32 1.0, %v273
        %v275 = vtanh.pop %v268
        %277 = vrot.lane.b32.xlu0 %v107, 32
        %v278 = vpop.permute.xlu0 %277
        %v280 = vmul.f32 %v274, %v278
        %282 = vrot.lane.b32.xlu0 %v275, 64
        %v283 = vpop.permute.xlu0 %282
        %v285 = vmul.f32 %v274, %v283
        %287 = vrot.lane.b32.xlu0 %v285, 32
        %v288 = vpop.permute.xlu0 %287
        %v290 = vadd.f32 %v280, %v288
        %v291 = vtanh.pop %v290
        %293 = vrot.lane.b32.xlu0 %v291, 64
        %v294 = vpop.permute.xlu0 %293
        %v296 = vmul.f32 %v274, %v294
        %v297 = vld [vmem:[%s6] sm:$0xff]
        %v298 = vld [vmem:[%s6 + $0x8] sm:$0xff]
        %v299 = vld [vmem:[%s6 + $0x10] sm:$0xff]
        %v300 = vld [vmem:[%s6 + $0x18] sm:$0xff]
        %v301 = vld [vmem:[%s7] sm:$0x1]
        %v303 = vlaneseq
        %v304 = vshrl.u32 %v303, 7
        %v305 = vsub.s32 0, %v304
        %v306 = vrot.slane %v301, %v305
        %309 = vrot.lane.b32.xlu0 %v296, 32
        %v310 = vpop.permute.xlu0 %309
        %v311 = vsel %vm70, %v310, 0
        %313 = vmatprep.subr.mxu0 0.0
        %314 = vmatpush1.msra.mxu0 0.0
        %315 = vmatprep.subr.mxu0 0.0
        %316 = vmatpush1.msra.mxu0 0.0
        %317 = vmatprep.subr.mxu0 0.0
        %318 = vmatpush1.msra.mxu0 0.0
        %319 = vmatprep.subr.mxu0 0.0
        %320 = vmatpush1.msra.mxu0 0.0
        %321 = vmatprep.subr.mxu0 0.0
        %322 = vmatpush1.msra.mxu0 0.0
        %323 = vmatprep.subr.mxu0 0.0
        %324 = vmatpush1.msra.mxu0 0.0
        %325 = vmatprep.subr.mxu0 0.0
        %326 = vmatpush1.msra.mxu0 0.0
        %327 = vmatprep.subr.mxu0 0.0
        %328 = vmatpush1.msra.mxu0 0.0
        %329 = vmatprep.subr.mxu0 0.0
        %330 = vmatpush1.msra.mxu0 0.0
        %331 = vmatprep.subr.mxu0 0.0
        %332 = vmatpush1.msra.mxu0 0.0
        %333 = vmatprep.subr.mxu0 0.0
        %334 = vmatpush1.msra.mxu0 0.0
        %335 = vmatprep.subr.mxu0 0.0
        %336 = vmatpush1.msra.mxu0 0.0
        %337 = vmatprep.subr.mxu0 0.0
        %338 = vmatpush1.msra.mxu0 %v300
        %339 = vmatprep.subr.mxu0 0.0
        %340 = vmatpush1.msra.mxu0 %v299
        %341 = vmatprep.subr.mxu0 0.0
        %342 = vmatpush1.msra.mxu0 %v298
        %343 = vmatprep.subr.mxu0 0.0
        %344 = vmatpush1.msra.mxu0 %v297
        %345 = vmatprep.subr.mxu0 0.0
        %346 = vmatpush2.msra.mxu0 0.0
        %347 = vmatprep.subr.mxu0 0.0
        %348 = vmatpush2.msra.mxu0 0.0
        %349 = vmatprep.subr.mxu0 0.0
        %350 = vmatpush2.msra.mxu0 0.0
        %351 = vmatprep.subr.mxu0 0.0
        %352 = vmatpush2.msra.mxu0 0.0
        %353 = vmatprep.subr.mxu0 0.0
        %354 = vmatpush2.msra.mxu0 0.0
        %355 = vmatprep.subr.mxu0 0.0
        %356 = vmatpush2.msra.mxu0 0.0
        %357 = vmatprep.subr.mxu0 0.0
        %358 = vmatpush2.msra.mxu0 0.0
        %359 = vmatprep.subr.mxu0 0.0
        %360 = vmatpush2.msra.mxu0 0.0
        %361 = vmatprep.subr.mxu0 0.0
        %362 = vmatpush2.msra.mxu0 0.0
        %363 = vmatprep.subr.mxu0 0.0
        %364 = vmatpush2.msra.mxu0 0.0
        %365 = vmatprep.subr.mxu0 0.0
        %366 = vmatpush2.msra.mxu0 0.0
        %367 = vmatprep.subr.mxu0 0.0
        %368 = vmatpush2.msra.mxu0 0.0
        %369 = vmatprep.subr.mxu0 0.0
        %370 = vmatpush2.msra.mxu0 0.0
        %371 = vmatprep.subr.mxu0 0.0
        %372 = vmatpush2.msra.mxu0 0.0
        %373 = vmatprep.subr.mxu0 0.0
        %374 = vmatpush2.msra.mxu0 0.0
        %375 = vmatprep.subr.mxu0 0.0
        %376 = vmatpush2.msra.mxu0 0.0
        %377 = vmatprep.mubr.f32.mxu0 0.0
        %378 = vmatmul.mubr.f32.gmra.mxu0 %v311
        %v379 = vpop.f32.mrf.mxu0
        %v380 = vadd.f32 %v306, %v379
        %v381 = vpop.f32.mrf.mxu0
        %382 = vdwg.mxu0
        %s383 = smul.u32 %s89, 8
        %s384 = scalar_lea.vmem [#allocation6], %s383
        %v385 = vld [vmem:[%s384] sm:$0xff]
        %v386 = vadd.f32 %v380, %v385
        %v387 = vsel %vm187, %v386, -inf
        %388 = vmax.xlane.f32.xlu0 %v387
        %v389 = vpop.xlane.xlu0 %388
        %vm390 = vcmp.eq.f32.partialorder %v386, %v389
        %v391 = vsel %vm390, %v87, 16
        %v392 = vsel %vm187, %v391, 2147483647
        %v393 = vand.u32 %v392, 65535
        %v394 = vshra.s32 %v392, 16
        %v395 = vcvt.s32.f32 %v393
        %v396 = vcvt.s32.f32 %v394
        %397 = vmin.xlane.f32.xlu0 %v396
        %v398 = vpop.xlane.xlu0 %397
        %vm399 = vcmp.eq.f32.partialorder %v396, %v398
        %v400 = vsel %vm399, %v395, inf
        %401 = vmin.xlane.f32.xlu0 %v400
        %v402 = vpop.xlane.xlu0 %401
        %v403 = vcvt.f32.s32 %v402
        %v404 = vcvt.f32.s32 %v398
        %v405 = vshll.u32 %v404, 16
        %v406 = vadd.s32 %v405, %v403
        %408 = vst.msk [vmem:[#allocation2] sm:$0xff] %vm70, %v310
        %410 = vrot.lane.b32.xlu0 %v290, 96
        %v411 = vpop.permute.xlu0 %410
        %413 = vst.msk [vmem:[#allocation3] sm:$0xff] %vm70, %v411
        %414 = vst.msk [vmem:[#allocation4] sm:$0xff] %vm74, %v406
        %s415 = scalar_lea.vmem %s8, %s383
        %416 = vst.msk [vmem:[%s415] sm:$0xff] %vm74, %v406
        %v417 = vrot.slane %v406, 4
        %vm418 = vcmp.gt.s32.totalorder %v406, %v417
        %v419 = vsel %vm418, %v406, %v417
        %v420 = vrot.slane %v419, 2
        %vm421 = vcmp.gt.s32.totalorder %v419, %v420
        %v422 = vsel %vm421, %v419, %v420
        %v423 = vrot.slane %v422, 1
        %vm424 = vcmp.gt.s32.totalorder %v422, %v423
        %v425 = vsel %vm424, %v422, %v423
        %s426 = vtos %v425
        %p427 = scmp.le.s32.totalorder %s426, 0
        %s428 = scalar_select %p427, 1, 0
        %429 = sst [smem:[%s76]] %s428
      $region56: #{tpu_custom_call.1} parent=49 // pred_fallthru
        _
    $region50: #{tpu_custom_call.1} parent=1 // loop_footer
      %s93 = sadd.s32 1, %s89
    $region51: #{tpu_custom_call.1} parent=1 // loop_footer_branch
      %88 = sbr.rel target = $region47
    $region52: #{tpu_custom_call.1} parent=1 // loop_exit
      _
    %v430 = vld [vmem:[#allocation2] sm:$0xff]
    %431 = vst.msk [vmem:[#allocation12] sm:$0xff] %vm70, %v430
    // Predicated region
    $region57: #{tpu_custom_call.1} parent=1 // pred_check
      _
    $region58: #{tpu_custom_call.1} parent=1 // pred_check_branch
      %433 = sbr.rel (0) target = $region60
    $region59: #{tpu_custom_call.1} parent=1 // pred_region
      _
    $region60: #{tpu_custom_call.1} parent=1 // pred_fallthru
      _
    // Predicated region
    $region61: #{tpu_custom_call.1} parent=1 // pred_check
      _
    $region62: #{tpu_custom_call.1} parent=1 // pred_check_branch
      %435 = sbr.rel (0) target = $region64
    $region63: #{tpu_custom_call.1} parent=1 // pred_region
      %s437 = ssub.s32 128, 128
      %438 = vsyncadd [#allocation8], %s437
      %s440 = sshll.u32 [#allocation12], 4
      %s441 = int_to_ptr.vmem [resolvable:$true] %s440
      %443 = dma.vmem_to_hbm [thread:$0]  %s441, 128, %s9, [#allocation8]
    $region64: #{tpu_custom_call.1} parent=1 // pred_fallthru
      _
    // Predicated region
    $region65: #{tpu_custom_call.1} parent=1 // pred_check
      _
    $region66: #{tpu_custom_call.1} parent=1 // pred_check_branch
      %445 = sbr.rel (0) target = $region68
    $region67: #{tpu_custom_call.1} parent=1 // pred_region
      _
    $region68: #{tpu_custom_call.1} parent=1 // pred_fallthru
      _
    // Predicated region
    $region69: #{tpu_custom_call.1} parent=1 // pred_check
      _
    $region70: #{tpu_custom_call.1} parent=1 // pred_check_branch
      %447 = sbr.rel (0) target = $region72
    $region71: #{tpu_custom_call.1} parent=1 // pred_region
      %448 = dma.done [#allocation8], 128
    $region72: #{tpu_custom_call.1} parent=1 // pred_fallthru
      _
    %449 = vsyncpa [#allocation7], 1
    %450 = vsyncpa [#allocation10], 1
    %451 = vsyncpa [#allocation8], 1

</llo_original>
